<compile_context>
chip_gen: v7x
topology: tpu7x:2x2x1
jax: 0.10.0
libtpu: 0.0.40
codegen_flags: <defaults>
</compile_context>

<pallas_src>
import jax
import jax.numpy as jnp
from jax.experimental import pallas as pl
from jax.experimental.pallas import tpu as pltpu

MIN_VALUE = 1.25
MAX_VALUE = 2.5
STRIDE = 3
PADDING = 4
OUTPUT_PADDING = 1
KSIZE = 1


def _out_dim(d_in):
    return (d_in - 1) * STRIDE - 2 * PADDING + (KSIZE - 1) + OUTPUT_PADDING + 1


def _num_tensorcores():
    """Best-effort TensorCore count (2 only on dual-TC chips like v7x)."""
    try:
        info = pltpu.get_tpu_info()
        for name in ("num_cores", "tensorcore_count", "num_tensorcores",
                     "cores_per_chip", "core_count"):
            v = getattr(info, name, None)
            if isinstance(v, int) and v > 0:
                return v
    except Exception:
        pass
    try:
        kind = jax.devices()[0].device_kind.lower()
        if "v7" in kind:
            return 2
    except Exception:
        pass
    return 1


def convt_clamp_kernel(x_ref, wsel_ref, selw_ref, b_ref, o_ref):
    # x_ref:    (1, C*H_in, NB*W_in)   VMEM  batch chunk, batch along lanes
    # wsel_ref: (H_out, C*H_in)        VMEM  weight-folded row scatter selector
    # selw_ref: (NB*W_in, NB*W_out)    VMEM  block-diagonal column scatter selector
    # b_ref:    (1,)                   SMEM  bias scalar
    # o_ref:    (1, H_out, NB*W_out)   VMEM  lane-dense output slab
    rows = jnp.dot(wsel_ref[...], x_ref[0],
                   preferred_element_type=jnp.float32)            # (H_out, NB*W_in)
    scattered = jnp.dot(rows, selw_ref[...],
                        preferred_element_type=jnp.float32)       # (H_out, NB*W_out)
    out = jnp.minimum(jnp.maximum(scattered + b_ref[0], MIN_VALUE), MAX_VALUE)
    o_ref[0] = out.astype(o_ref.dtype)


def conv_transpose_clamp(x, w, b):
    """x: (N, C, H, W) f32; w: (C, 1) f32 (1x1 ConvTranspose2d weight squeezed);
    b: (1,) f32  ->  (N, 1, H_out, W_out) f32."""
    n, c, h_in, w_in = x.shape
    h_out, w_out = _out_dim(h_in), _out_dim(w_in)
    assert h_out > 0 and w_out > 0, "output spatial size must be positive"

    # grid = number of TensorCores (only split when it actually shards work)
    num_tc = _num_tensorcores()
    g = num_tc if (num_tc > 1 and n % num_tc == 0) else 1
    nb = n // g

    # ----- wrapper-side constants (built once, resident across the grid) -----
    yy = jnp.arange(h_out, dtype=jnp.int32)[:, None]                 # (H_out, 1)
    ii = jnp.arange(h_in, dtype=jnp.int32)[None, :]                  # (1, H_in)
    sel_h = (yy == STRIDE * ii - PADDING).astype(jnp.float32)        # (H_out, H_in)
    # fold the 1x1 conv weight into the row selector:
    #   wsel[y, c*H_in + i] = w[c] * [y == 3*i - 4]
    wsel = (sel_h[:, None, :] * w.reshape(1, c, 1)).reshape(h_out, c * h_in)

    jj = jnp.arange(w_in, dtype=jnp.int32)[:, None]                  # (W_in, 1)
    xc = jnp.arange(w_out, dtype=jnp.int32)[None, :]                 # (1, W_out)
    sel_w = (xc == STRIDE * jj - PADDING).astype(jnp.float32)        # (W_in, W_out)
    # block-diagonal column scatter: each batch element owns its own lane block
    selw_bd = jnp.kron(jnp.eye(nb, dtype=jnp.float32), sel_w)        # (NB*W_in, NB*W_out)

    # layout plumbing: batch chunk along the lane axis -> (g, C*H_in, NB*W_in)
    x3 = (x.reshape(g, nb, c, h_in, w_in)
            .transpose(0, 2, 3, 1, 4)
            .reshape(g, c * h_in, nb * w_in))

    flops = 2 * n * (h_out * c * h_in * w_in + h_out * w_in * w_out)
    bytes_acc = 4 * (x3.size + wsel.size + selw_bd.size + g * h_out * nb * w_out + 1)

    out = pl.pallas_call(
        convt_clamp_kernel,
        out_shape=jax.ShapeDtypeStruct((g, h_out, nb * w_out), jnp.float32),
        grid_spec=pltpu.PrefetchScalarGridSpec(
            num_scalar_prefetch=0,
            grid=(g,),
            in_specs=[
                pl.BlockSpec((1, c * h_in, nb * w_in), lambda i: (i, 0, 0)),
                pl.BlockSpec((h_out, c * h_in), lambda i: (0, 0)),        # constant -> resident
                pl.BlockSpec((nb * w_in, nb * w_out), lambda i: (0, 0)),  # constant -> resident
                pl.BlockSpec(memory_space=pltpu.MemorySpace.SMEM),
            ],
            out_specs=pl.BlockSpec((1, h_out, nb * w_out), lambda i: (i, 0, 0)),
        ),
        compiler_params=pltpu.CompilerParams(dimension_semantics=("parallel",)),
        cost_estimate=pl.CostEstimate(flops=flops, transcendentals=0,
                                      bytes_accessed=bytes_acc),
    )(x3, wsel, selw_bd, b)

    # restore (N, 1, H_out, W_out): kernel lane layout is [y, b*W_out + x]
    out = (out.reshape(g, h_out, nb, w_out)
              .transpose(0, 2, 1, 3)
              .reshape(n, 1, h_out, w_out))
    return out


def ref_forward(x, w, b):
    """Pure-JAX reference of the PyTorch forward (ConvTranspose2d 1x1 + clamps)."""
    n, c, h_in, w_in = x.shape
    h_out, w_out = _out_dim(h_in), _out_dim(w_in)
    contrib = jnp.einsum("nchw,co->nohw", x, w)
    out = jnp.full((n, 1, h_out, w_out), b[0], jnp.float32)
    for i in range(h_in):
        y = STRIDE * i - PADDING
        if not (0 <= y < h_out):
            continue
        for j in range(w_in):
            xx = STRIDE * j - PADDING
            if 0 <= xx < w_out:
                out = out.at[:, :, y, xx].add(contrib[:, :, i, j])
    return jnp.clip(out, MIN_VALUE, MAX_VALUE)


if __name__ == "__main__":
    # NOTE: the original script's example input (1, 3, 10, 3) yields a zero-width
    # output ((3-1)*3 - 8 + 1 + 1 = 0), so we use a small valid spatial size.
    key = jax.random.PRNGKey(0)
    kx, kw, kb = jax.random.split(key, 3)
    x = jax.random.normal(kx, (2, 3, 10, 10), jnp.float32)
    # ConvTranspose2d weight shape is (in_c, out_c, kH, kW) = (3, 1, 1, 1); squeeze to (3, 1).
    w = 0.5 * jax.random.normal(kw, (3, 1), jnp.float32)
    b = 0.1 * jax.random.normal(kb, (1,), jnp.float32)

    out = conv_transpose_clamp(x, w, b)
    out = jax.block_until_ready(out)

    ref = ref_forward(x, w, b)
    assert out.shape == (2, 1, 21, 21), out.shape
    assert jnp.allclose(out, ref, atol=1e-5, rtol=1e-5), float(jnp.abs(out - ref).max())
    print("KERNEL_OK")
</pallas_src>

<mosaic_0001>
module attributes {stable_mosaic.version = 11 : i64} {
  func.func @convt_clamp_kernel(%arg0: i32, %arg1: memref<1x30x20xf32, #tpu.memory_space<vmem>>, %arg2: memref<21x30xf32, #tpu.memory_space<vmem>>, %arg3: memref<20x42xf32, #tpu.memory_space<vmem>>, %arg4: memref<1xf32, #tpu.memory_space<smem>>, %arg5: memref<1x21x42xf32, #tpu.memory_space<vmem>>) attributes {dimension_semantics = [#tpu.dimension_semantics<parallel>], iteration_bounds = array<i64: 1>, scalar_prefetch = 0 : i64, scratch_operands = 0 : i64, tpu.core_type = #tpu.core_type<tc>, window_params = [{transform_indices = @transform_0, window_bounds = array<i64: 1, 30, 20>}, {pipeline_mode = #tpu.pipeline_mode<synchronous>, transform_indices = @transform_1, window_bounds = array<i64: 21, 30>}, {pipeline_mode = #tpu.pipeline_mode<synchronous>, transform_indices = @transform_2, window_bounds = array<i64: 20, 42>}, {transform_indices = @transform_3, window_bounds = array<i64: 1>}, {transform_indices = @transform_4, window_bounds = array<i64: 1, 21, 42>}]} {
    %c0 = arith.constant 0 : index
    %c0_0 = arith.constant 0 : index
    %0 = vector.load %arg2[%c0, %c0_0] : memref<21x30xf32, #tpu.memory_space<vmem>>, vector<21x30xf32>
    %c0_1 = arith.constant 0 : index
    %c0_2 = arith.constant 0 : index
    %c0_3 = arith.constant 0 : index
    %1 = vector.load %arg1[%c0_1, %c0_2, %c0_3] : memref<1x30x20xf32, #tpu.memory_space<vmem>>, vector<1x30x20xf32>
    %2 = vector.shape_cast %1 : vector<1x30x20xf32> to vector<30x20xf32>
    %cst = arith.constant dense<0.000000e+00> : vector<21x20xf32>
    %3 = tpu.matmul %0, %2, %cst {dimension_numbers = #tpu.dot_dimension_numbers<[1], [0], [0], [1], [0, 0, 1, 1], [], []>} : vector<21x30xf32>, vector<30x20xf32>, vector<21x20xf32> -> vector<21x20xf32>
    %c0_4 = arith.constant 0 : index
    %c0_5 = arith.constant 0 : index
    %4 = vector.load %arg3[%c0_4, %c0_5] : memref<20x42xf32, #tpu.memory_space<vmem>>, vector<20x42xf32>
    %cst_6 = arith.constant dense<0.000000e+00> : vector<21x42xf32>
    %5 = tpu.matmul %3, %4, %cst_6 {dimension_numbers = #tpu.dot_dimension_numbers<[1], [0], [0], [1], [0, 0, 1, 1], [], []>} : vector<21x20xf32>, vector<20x42xf32>, vector<21x42xf32> -> vector<21x42xf32>
    %c0_7 = arith.constant 0 : index
    %6 = memref.load %arg4[%c0_7] : memref<1xf32, #tpu.memory_space<smem>>
    %7 = vector.broadcast %6 : f32 to vector<21x42xf32>
    %8 = arith.addf %5, %7 : vector<21x42xf32>
    %cst_8 = arith.constant 1.250000e+00 : f32
    %9 = vector.broadcast %cst_8 : f32 to vector<21x42xf32>
    %10 = arith.maximumf %8, %9 : vector<21x42xf32>
    %cst_9 = arith.constant 2.500000e+00 : f32
    %11 = vector.broadcast %cst_9 : f32 to vector<21x42xf32>
    %12 = arith.minimumf %10, %11 : vector<21x42xf32>
    %c0_10 = arith.constant 0 : index
    %c0_11 = arith.constant 0 : index
    %c0_12 = arith.constant 0 : index
    %13 = vector.load %arg5[%c0_10, %c0_11, %c0_12] : memref<1x21x42xf32, #tpu.memory_space<vmem>>, vector<1x21x42xf32>
    %14 = vector.shape_cast %13 : vector<1x21x42xf32> to vector<21x42xf32>
    %15 = vector.shape_cast %12 : vector<21x42xf32> to vector<1x21x42xf32>
    tpu.vector_store %arg5[%c0_10, %c0_11, %c0_12], %15 {strides = array<i32>} : memref<1x21x42xf32, #tpu.memory_space<vmem>>, vector<1x21x42xf32>,
    return
  }
  func.func @transform_0(%arg0: i32) -> (i32, i32, i32) {
    %c0_i32 = arith.constant 0 : i32
    %c0_i32_0 = arith.constant 0 : i32
    %c0_i32_1 = arith.constant 0 : i32
    return %arg0, %c0_i32, %c0_i32_0 : i32, i32, i32
  }
  func.func @transform_1(%arg0: i32) -> (i32, i32) {
    %c0_i32 = arith.constant 0 : i32
    %c0_i32_0 = arith.constant 0 : i32
    %c0_i32_1 = arith.constant 0 : i32
    return %c0_i32, %c0_i32_0 : i32, i32
  }
  func.func @transform_2(%arg0: i32) -> (i32, i32) {
    %c0_i32 = arith.constant 0 : i32
    %c0_i32_0 = arith.constant 0 : i32
    %c0_i32_1 = arith.constant 0 : i32
    return %c0_i32, %c0_i32_0 : i32, i32
  }
  func.func @transform_3(%arg0: i32) -> i32 {
    %c0_i32 = arith.constant 0 : i32
    %c0_i32_0 = arith.constant 0 : i32
    return %c0_i32 : i32
  }
  func.func @transform_4(%arg0: i32) -> (i32, i32, i32) {
    %c0_i32 = arith.constant 0 : i32
    %c0_i32_0 = arith.constant 0 : i32
    %c0_i32_1 = arith.constant 0 : i32
    return %arg0, %c0_i32, %c0_i32_0 : i32, i32, i32
  }
}

</mosaic_0001>

<llo_original>
// kernel: tpu_custom_call.1
$region0: #{tpu_custom_call.1}
  #allocation0 [shape = 'u32[]', space=smem, size = 0x4, offset = 0x4, fixed_abs, tag = 'smem constant byte address 0x4 - core index']
  #allocation1 [shape = 'u32[144,128]{1,0:T(1,128)}', space=vmem, size = 0x12000, scoped, tag = 'internal scratch']
  #allocation2 [shape = 'f32[1]{0:T(128)S(6)}', space=smem, size = 0x200, scoped, tag = 'scoped memory for tpu_custom_call.1']
  %s0 = inlined_call_operand.vmem [shape: f32[1,30,20], index: 0, kind: input, shape index: {}]
  %s1 = inlined_call_operand.vmem [shape: f32[21,30], index: 1, kind: input, shape index: {}]
  %s2 = inlined_call_operand.vmem [shape: f32[20,42], index: 2, kind: input, shape index: {}]
  %s3 = inlined_call_operand.<no memory space> [shape: f32[1], index: 3, kind: input, shape index: {}]
  %s4 = inlined_call_operand.vmem [shape: f32[1,21,42], index: 4, kind: output, shape index: {}]
  %s5 = sld [smem:[#allocation0]]
  $region26: #{tpu_custom_call.1} parent=0
    _
  %s7 = ssub.s32 1, %s5
  %s8 = scalar_select 0, %s7, %s5
  %9 = sst [smem:[#allocation2]] %s3
  // Predicated region
  $region2: #{tpu_custom_call.1} parent=0 // pred_check
    _
  $region3: #{tpu_custom_call.1} parent=0 // pred_check_branch
    %11 = sbr.rel (0) target = $region5
  $region4: #{tpu_custom_call.1} parent=0 // pred_region
    _
  $region5: #{tpu_custom_call.1} parent=0 // pred_fallthru
    _
  // Predicated region
  $region6: #{tpu_custom_call.1} parent=0 // pred_check
    _
  $region7: #{tpu_custom_call.1} parent=0 // pred_check_branch
    %13 = sbr.rel (0) target = $region9
  $region8: #{tpu_custom_call.1} parent=0 // pred_region
    _
  $region9: #{tpu_custom_call.1} parent=0 // pred_fallthru
    _
  // Predicated region
  $region10: #{tpu_custom_call.1} parent=0 // pred_check
    _
  $region11: #{tpu_custom_call.1} parent=0 // pred_check_branch
    %15 = sbr.rel (0) target = $region13
  $region12: #{tpu_custom_call.1} parent=0 // pred_region
    _
  $region13: #{tpu_custom_call.1} parent=0 // pred_fallthru
    _
  // Predicated region
  $region14: #{tpu_custom_call.1} parent=0 // pred_check
    _
  $region15: #{tpu_custom_call.1} parent=0 // pred_check_branch
    %17 = sbr.rel (0) target = $region17
  $region16: #{tpu_custom_call.1} parent=0 // pred_region
    _
  $region17: #{tpu_custom_call.1} parent=0 // pred_fallthru
    _
  %v18 = vld [vmem:[%s1] sm:$0xff]
  %v19 = vld [vmem:[%s1 + $0x8] sm:$0xff]
  %v20 = vld [vmem:[%s1 + $0x10] sm:$0x1f]
  %v21 = vld [vmem:[%s0] sm:$0xff]
  %v22 = vld [vmem:[%s0 + $0x8] sm:$0xff]
  %v23 = vld [vmem:[%s0 + $0x10] sm:$0xff]
  %v24 = vld [vmem:[%s0 + $0x18] sm:$0x3f]
  %vm25 = vcmask 244736
  %v27 = vsel %vm25, %v18, 0
  %v30 = vsel %vm25, %v19, 0
  %v33 = vsel %vm25, %v20, 0
  %vm35 = vcmask 1045504
  %v37 = vsel %vm35, %v24, 0
  %39 = vmatprep.subr.mxu0 0.0
  %40 = vmatpush1.msra.mxu0 %v21
  %41 = vmatprep.subr.mxu0 0.0
  %42 = vmatpush1.msra.mxu0 %v22
  %43 = vmatprep.subr.mxu0 0.0
  %44 = vmatpush1.msra.mxu0 %v23
  %45 = vmatprep.subr.mxu0 0.0
  %46 = vmatpush1.msra.mxu0 %v37
  %47 = vmatprep.subr.mxu0 0.0
  %48 = vmatpush1.msra.mxu0 0.0
  %49 = vmatprep.subr.mxu0 0.0
  %50 = vmatpush1.msra.mxu0 0.0
  %51 = vmatprep.subr.mxu0 0.0
  %52 = vmatpush1.msra.mxu0 0.0
  %53 = vmatprep.subr.mxu0 0.0
  %54 = vmatpush1.msra.mxu0 0.0
  %55 = vmatprep.subr.mxu0 0.0
  %56 = vmatpush1.msra.mxu0 0.0
  %57 = vmatprep.subr.mxu0 0.0
  %58 = vmatpush1.msra.mxu0 0.0
  %59 = vmatprep.subr.mxu0 0.0
  %60 = vmatpush1.msra.mxu0 0.0
  %61 = vmatprep.subr.mxu0 0.0
  %62 = vmatpush1.msra.mxu0 0.0
  %63 = vmatprep.subr.mxu0 0.0
  %64 = vmatpush1.msra.mxu0 0.0
  %65 = vmatprep.subr.mxu0 0.0
  %66 = vmatpush1.msra.mxu0 0.0
  %67 = vmatprep.subr.mxu0 0.0
  %68 = vmatpush1.msra.mxu0 0.0
  %69 = vmatprep.subr.mxu0 0.0
  %70 = vmatpush1.msra.mxu0 0.0
  %71 = vmatprep.subr.mxu0 0.0
  %72 = vmatpush1.msra.mxu0 0.0
  %73 = vmatprep.subr.mxu0 0.0
  %74 = vmatpush1.msra.mxu0 0.0
  %75 = vmatprep.subr.mxu0 0.0
  %76 = vmatpush1.msra.mxu0 0.0
  %77 = vmatprep.subr.mxu0 0.0
  %78 = vmatpush1.msra.mxu0 0.0
  %79 = vmatprep.subr.mxu0 0.0
  %80 = vmatpush1.msra.mxu0 0.0
  %81 = vmatprep.subr.mxu0 0.0
  %82 = vmatpush1.msra.mxu0 0.0
  %83 = vmatprep.subr.mxu0 0.0
  %84 = vmatpush1.msra.mxu0 0.0
  %85 = vmatprep.subr.mxu0 0.0
  %86 = vmatpush1.msra.mxu0 0.0
  %87 = vmatprep.subr.mxu0 0.0
  %88 = vmatpush1.msra.mxu0 0.0
  %89 = vmatprep.subr.mxu0 0.0
  %90 = vmatpush1.msra.mxu0 0.0
  %91 = vmatprep.subr.mxu0 0.0
  %92 = vmatpush1.msra.mxu0 0.0
  %93 = vmatprep.subr.mxu0 0.0
  %94 = vmatpush1.msra.mxu0 0.0
  %95 = vmatprep.subr.mxu0 0.0
  %96 = vmatpush1.msra.mxu0 0.0
  %97 = vmatprep.subr.mxu0 0.0
  %98 = vmatpush1.msra.mxu0 0.0
  %99 = vmatprep.subr.mxu0 0.0
  %100 = vmatpush1.msra.mxu0 0.0
  %101 = vmatprep.subr.mxu0 0.0
  %102 = vmatpush1.msra.mxu0 0.0
  %103 = vmatprep.mubr.f32.mxu0 0.0
  %104 = vmatmul.mubr.f32.gmra.mrb[0].mxu0 %v27
  %v105 = vpop.f32.mrb[0].mxu0
  %v106 = vadd.f32 0.0, %v105
  %v107 = vpop.f32.mrb[0].mxu0
  %108 = vmatprep.mubr.f32.mxu0 0.0
  %109 = vmatmul.mubr.f32.gmra.mrb[0].mxu0 %v30
  %v110 = vpop.f32.mrb[0].mxu0
  %v111 = vadd.f32 0.0, %v110
  %v112 = vpop.f32.mrb[0].mxu0
  %113 = vmatprep.mubr.f32.mxu0 0.0
  %114 = vmatmul.mubr.f32.gmra.mrb[0].mxu0 %v33
  %v115 = vpop.f32.mrb[0].mxu0
  %v116 = vadd.f32 0.0, %v115
  %v117 = vpop.f32.mrb[0].mxu0
  %118 = vdwg.mxu0
  %v119 = vld [vmem:[%s2] sm:$0xff]
  %v120 = vld [vmem:[%s2 + $0x8] sm:$0xff]
  %v121 = vld [vmem:[%s2 + $0x10] sm:$0xf]
  %s122 = sld [smem:[#allocation2]]
  %v123 = vstv %s122
  %vm124 = vcmask 162816
  %v126 = vsel %vm124, %v106, 0
  %v129 = vsel %vm124, %v111, 0
  %v132 = vsel %vm124, %v116, 0
  %vm134 = vcmask 1043456
  %v136 = vsel %vm134, %v121, 0
  %138 = vmatprep.subr.mxu0 0.0
  %139 = vmatpush1.msra.mxu0 %v119
  %140 = vmatprep.subr.mxu0 0.0
  %141 = vmatpush1.msra.mxu0 %v120
  %142 = vmatprep.subr.mxu0 0.0
  %143 = vmatpush1.msra.mxu0 %v136
  %144 = vmatprep.subr.mxu0 0.0
  %145 = vmatpush1.msra.mxu0 0.0
  %146 = vmatprep.subr.mxu0 0.0
  %147 = vmatpush1.msra.mxu0 0.0
  %148 = vmatprep.subr.mxu0 0.0
  %149 = vmatpush1.msra.mxu0 0.0
  %150 = vmatprep.subr.mxu0 0.0
  %151 = vmatpush1.msra.mxu0 0.0
  %152 = vmatprep.subr.mxu0 0.0
  %153 = vmatpush1.msra.mxu0 0.0
  %154 = vmatprep.subr.mxu0 0.0
  %155 = vmatpush1.msra.mxu0 0.0
  %156 = vmatprep.subr.mxu0 0.0
  %157 = vmatpush1.msra.mxu0 0.0
  %158 = vmatprep.subr.mxu0 0.0
  %159 = vmatpush1.msra.mxu0 0.0
  %160 = vmatprep.subr.mxu0 0.0
  %161 = vmatpush1.msra.mxu0 0.0
  %162 = vmatprep.subr.mxu0 0.0
  %163 = vmatpush1.msra.mxu0 0.0
  %164 = vmatprep.subr.mxu0 0.0
  %165 = vmatpush1.msra.mxu0 0.0
  %166 = vmatprep.subr.mxu0 0.0
  %167 = vmatpush1.msra.mxu0 0.0
  %168 = vmatprep.subr.mxu0 0.0
  %169 = vmatpush1.msra.mxu0 0.0
  %170 = vmatprep.subr.mxu0 0.0
  %171 = vmatpush1.msra.mxu0 0.0
  %172 = vmatprep.subr.mxu0 0.0
  %173 = vmatpush1.msra.mxu0 0.0
  %174 = vmatprep.subr.mxu0 0.0
  %175 = vmatpush1.msra.mxu0 0.0
  %176 = vmatprep.subr.mxu0 0.0
  %177 = vmatpush1.msra.mxu0 0.0
  %178 = vmatprep.subr.mxu0 0.0
  %179 = vmatpush1.msra.mxu0 0.0
  %180 = vmatprep.subr.mxu0 0.0
  %181 = vmatpush1.msra.mxu0 0.0
  %182 = vmatprep.subr.mxu0 0.0
  %183 = vmatpush1.msra.mxu0 0.0
  %184 = vmatprep.subr.mxu0 0.0
  %185 = vmatpush1.msra.mxu0 0.0
  %186 = vmatprep.subr.mxu0 0.0
  %187 = vmatpush1.msra.mxu0 0.0
  %188 = vmatprep.subr.mxu0 0.0
  %189 = vmatpush1.msra.mxu0 0.0
  %190 = vmatprep.subr.mxu0 0.0
  %191 = vmatpush1.msra.mxu0 0.0
  %192 = vmatprep.subr.mxu0 0.0
  %193 = vmatpush1.msra.mxu0 0.0
  %194 = vmatprep.subr.mxu0 0.0
  %195 = vmatpush1.msra.mxu0 0.0
  %196 = vmatprep.subr.mxu0 0.0
  %197 = vmatpush1.msra.mxu0 0.0
  %198 = vmatprep.subr.mxu0 0.0
  %199 = vmatpush1.msra.mxu0 0.0
  %200 = vmatprep.subr.mxu0 0.0
  %201 = vmatpush1.msra.mxu0 0.0
  %202 = vmatprep.mubr.f32.mxu0 0.0
  %203 = vmatmul.mubr.f32.gmra.mrb[0].mxu0 %v126
  %v204 = vpop.f32.mrb[0].mxu0
  %v205 = vadd.f32 %v123, %v204
  %v206 = vpop.f32.mrb[0].mxu0
  %207 = vmatprep.mubr.f32.mxu0 0.0
  %208 = vmatmul.mubr.f32.gmra.mrb[0].mxu0 %v129
  %v209 = vpop.f32.mrb[0].mxu0
  %v210 = vadd.f32 %v123, %v209
  %v211 = vpop.f32.mrb[0].mxu0
  %212 = vmatprep.mubr.f32.mxu0 0.0
  %213 = vmatmul.mubr.f32.gmra.mrb[0].mxu0 %v132
  %v214 = vpop.f32.mrb[0].mxu0
  %v215 = vadd.f32 %v123, %v214
  %v216 = vpop.f32.mrb[0].mxu0
  %217 = vdwg.mxu0
  %v218 = vmax.f32 %v205, 1.25
  %v219 = vmax.f32 %v210, 1.25
  %v220 = vmax.f32 %v215, 1.25
  %v221 = vmin.f32 %v218, 2.5
  %v222 = vmin.f32 %v219, 2.5
  %v223 = vmin.f32 %v220, 2.5
  %vm224 = vcmask 343040
  %225 = vst.msk [vmem:[%s4] sm:$0xff] %vm224, %v221
  %226 = vst.msk [vmem:[%s4 + $0x8] sm:$0xff] %vm224, %v222
  %vm227 = vcmask 339968
  %228 = vst.msk [vmem:[%s4 + $0x10] sm:$0x1f] %vm227, %v223
  // Predicated region
  $region18: #{tpu_custom_call.1} parent=0 // pred_check
    _
  $region19: #{tpu_custom_call.1} parent=0 // pred_check_branch
    %230 = sbr.rel (0) target = $region21
  $region20: #{tpu_custom_call.1} parent=0 // pred_region
    _
  $region21: #{tpu_custom_call.1} parent=0 // pred_fallthru
    _
  // Predicated region
  $region22: #{tpu_custom_call.1} parent=0 // pred_check
    _
  $region23: #{tpu_custom_call.1} parent=0 // pred_check_branch
    %232 = sbr.rel (0) target = $region25
  $region24: #{tpu_custom_call.1} parent=0 // pred_region
    _
  $region25: #{tpu_custom_call.1} parent=0 // pred_fallthru
    _

</llo_original>
